<compile_context>
chip_gen: v6e
topology: v6e:2x2x1
jax: 0.10.0
libtpu: 0.0.40
codegen_flags: <defaults>
</compile_context>

<pallas_src>
import functools
import math

import jax
import jax.numpy as jnp
from jax.experimental import pallas as pl
from jax.experimental.pallas import tpu as pltpu


# ---------------------------------------------------------------------------
# Tiled, K-accumulating linear:  (M, K) @ (K, N) + (1, N)
# ---------------------------------------------------------------------------
def _linear_kernel(x_ref, w_ref, b_ref, o_ref, acc_ref):
    @pl.when(pl.program_id(2) == 0)
    def _init():
        acc_ref[...] = jnp.zeros_like(acc_ref)

    acc_ref[...] += jnp.dot(
        x_ref[...], w_ref[...], preferred_element_type=jnp.float32
    )

    @pl.when(pl.program_id(2) == pl.num_programs(2) - 1)
    def _epilogue():
        # Bias added (and broadcast) only once, in the final K step.
        o_ref[...] = (acc_ref[...] + b_ref[...].astype(jnp.float32)).astype(o_ref.dtype)


def _pick_tile(dim, cap, align):
    """Largest tile <= cap that is a multiple of `align` and divides `dim`."""
    if dim <= cap:
        return dim
    t = (cap // align) * align
    while t >= align:
        if dim % t == 0:
            return t
        t -= align
    return dim  # fallback: full dimension


def linear(x, w, b, *, tm_cap=256, tn_cap=256, tk_cap=512):
    """x: (M, K), w: (K, N), b: (1, N) -> (M, N) = x @ w + b."""
    M, K = x.shape
    K2, N = w.shape
    assert K == K2 and b.shape == (1, N)

    tm = _pick_tile(M, tm_cap, 8)     # sublane dim of x / out
    tn = _pick_tile(N, tn_cap, 128)   # lane dim of w / out
    tk = _pick_tile(K, tk_cap, 128)   # lane dim of x, sublane dim of w
    grid = (M // tm, N // tn, K // tk)

    return pl.pallas_call(
        _linear_kernel,
        out_shape=jax.ShapeDtypeStruct((M, N), x.dtype),
        grid_spec=pltpu.PrefetchScalarGridSpec(
            num_scalar_prefetch=0,
            grid=grid,
            in_specs=[
                pl.BlockSpec((tm, tk), lambda i, j, k: (i, k)),
                pl.BlockSpec((tk, tn), lambda i, j, k: (k, j)),
                pl.BlockSpec((1, tn), lambda i, j, k: (0, j)),
            ],
            out_specs=pl.BlockSpec((tm, tn), lambda i, j, k: (i, j)),
            scratch_shapes=[pltpu.VMEM((tm, tn), jnp.float32)],
        ),
        compiler_params=pltpu.CompilerParams(
            dimension_semantics=("parallel", "parallel", "arbitrary")
        ),
    )(x, w, b)


# ---------------------------------------------------------------------------
# Flash-style causal attention, grid = (B, H, q_tile, kv_tile)
# ---------------------------------------------------------------------------
def _flash_attn_kernel(q_ref, k_ref, v_ref, o_ref, m_sc, l_sc, acc_sc, *, scale):
    qi = pl.program_id(2)
    ki = pl.program_id(3)

    @pl.when(ki == 0)
    def _init():
        m_sc[...] = jnp.full_like(m_sc, -jnp.inf)
        l_sc[...] = jnp.zeros_like(l_sc)
        acc_sc[...] = jnp.zeros_like(acc_sc)

    # Causal block skipping: kv tiles strictly above the diagonal contribute
    # nothing -> skip their compute (and their DMA, via the clamped index_map).
    @pl.when(ki <= qi)
    def _compute():
        # Fold 1/sqrt(D) into the small (tq, D) q tile, in the input dtype so the
        # QK^T matmul stays MXU-native (bf16 when the caller feeds bf16).
        q = q_ref[...] * jnp.asarray(scale, dtype=q_ref.dtype)      # (tq, D)
        k = k_ref[...]                                              # (tk, D)
        v = v_ref[...]                                              # (tk, D)

        # q @ k^T, contracting over D, f32 accumulation on the MXU.
        s = jax.lax.dot_general(
            q, k, (((1,), (1,)), ((), ())), preferred_element_type=jnp.float32
        )                                                           # (tq, tk)

        tq, tk = s.shape
        row = qi * tq + jax.lax.broadcasted_iota(jnp.int32, (tq, tk), 0)
        col = ki * tk + jax.lax.broadcasted_iota(jnp.int32, (tq, tk), 1)
        s = jnp.where(col <= row, s, -jnp.inf)

        # Online softmax statistics in f32.
        m_prev = m_sc[...]
        m_new = jnp.maximum(m_prev, jnp.max(s, axis=-1, keepdims=True))
        alpha = jnp.exp(m_prev - m_new)
        p = jnp.exp(s - m_new)
        l_sc[...] = alpha * l_sc[...] + jnp.sum(p, axis=-1, keepdims=True)
        acc_sc[...] = alpha * acc_sc[...] + jnp.dot(
            p.astype(v.dtype), v, preferred_element_type=jnp.float32
        )
        m_sc[...] = m_new

    # The diagonal tile is the last one contributing to this q block: normalize
    # once on the (tq, D) output (not on the (tq, tk) probabilities) and store.
    @pl.when(ki == qi)
    def _finalize():
        inv_l = pl.reciprocal(l_sc[...], approx=False)  # approx=True ok for bf16 outputs
        o_ref[...] = (acc_sc[...] * inv_l).astype(o_ref.dtype)


def flash_causal_attention(q, k, v, *, block=128):
    """q, k, v: (B, H, T, D) -> (B, H, T, D), causal softmax attention."""
    B, H, T, D = q.shape
    blk = min(block, T)
    assert T % blk == 0, "sequence length must be divisible by the attention block"
    n_blk = T // blk
    scale = 1.0 / math.sqrt(D)
    kernel = functools.partial(_flash_attn_kernel, scale=scale)

    q_spec = pl.BlockSpec((None, None, blk, D), lambda b, h, qi, ki: (b, h, qi, 0))
    # Clamp skipped (upper-triangular) kv tiles to the already-resident block so
    # no DMA is issued for them.
    kv_spec = pl.BlockSpec(
        (None, None, blk, D),
        lambda b, h, qi, ki: (b, h, jnp.minimum(ki, qi), 0),
    )
    o_spec = pl.BlockSpec((None, None, blk, D), lambda b, h, qi, ki: (b, h, qi, 0))

    return pl.pallas_call(
        kernel,
        out_shape=jax.ShapeDtypeStruct((B, H, T, D), q.dtype),
        grid_spec=pltpu.PrefetchScalarGridSpec(
            num_scalar_prefetch=0,
            grid=(B, H, n_blk, n_blk),
            in_specs=[q_spec, kv_spec, kv_spec],
            out_specs=o_spec,
            scratch_shapes=[
                pltpu.VMEM((blk, 1), jnp.float32),   # running max m
                pltpu.VMEM((blk, 1), jnp.float32),   # running denom l
                pltpu.VMEM((blk, D), jnp.float32),   # running output acc
            ],
        ),
        compiler_params=pltpu.CompilerParams(
            dimension_semantics=("parallel", "parallel", "parallel", "arbitrary")
        ),
    )(q, k, v)


# ---------------------------------------------------------------------------
# Module forward (glue in plain JAX: reshape / slice / transpose only)
# ---------------------------------------------------------------------------
def causal_self_attention(x, params, n_head, *, attn_block=128):
    B, T, C = x.shape
    hd = C // n_head

    # qkv = self.c_attn(x)
    qkv = linear(x.reshape(B * T, C), params["w_attn"], params["b_attn"])
    qkv = qkv.reshape(B, T, 3, n_head, hd)

    # split heads: (B, T, C) -> (B, n_head, T, hd)
    q = qkv[:, :, 0].transpose(0, 2, 1, 3)
    k = qkv[:, :, 1].transpose(0, 2, 1, 3)
    v = qkv[:, :, 2].transpose(0, 2, 1, 3)

    # y = F.scaled_dot_product_attention(q, k, v, is_causal=True)
    y = flash_causal_attention(q, k, v, block=attn_block)

    # merge heads and project
    y = y.transpose(0, 2, 1, 3).reshape(B * T, C)
    y = linear(y, params["w_proj"], params["b_proj"])
    return y.reshape(B, T, C)


# ---------------------------------------------------------------------------
# Pure-JAX reference (for correctness check)
# ---------------------------------------------------------------------------
def reference(x, params, n_head):
    B, T, C = x.shape
    hd = C // n_head
    hi = jax.lax.Precision.HIGHEST
    qkv = jnp.dot(x, params["w_attn"], precision=hi) + params["b_attn"][0]
    q, k, v = jnp.split(qkv, 3, axis=-1)
    q = q.reshape(B, T, n_head, hd).transpose(0, 2, 1, 3)
    k = k.reshape(B, T, n_head, hd).transpose(0, 2, 1, 3)
    v = v.reshape(B, T, n_head, hd).transpose(0, 2, 1, 3)
    s = jnp.einsum("bhqd,bhkd->bhqk", q, k, precision=hi) / math.sqrt(hd)
    mask = jnp.tril(jnp.ones((T, T), dtype=bool))
    s = jnp.where(mask, s, -jnp.inf)
    p = jax.nn.softmax(s, axis=-1)
    y = jnp.einsum("bhqk,bhkd->bhqd", p, v, precision=hi)
    y = y.transpose(0, 2, 1, 3).reshape(B, T, C)
    return jnp.dot(y, params["w_proj"], precision=hi) + params["b_proj"][0]


if __name__ == "__main__":
    # Small config consistent with the module: head_dim = 64 like GPT-2.
    B, T, C, n_head = 2, 16, 256, 4

    key = jax.random.PRNGKey(0)
    k_x, k_wa, k_ba, k_wp, k_bp = jax.random.split(key, 5)

    x = jax.random.normal(k_x, (B, T, C), dtype=jnp.float32)
    params = {
        # stored as (in, out) so forward is x @ W + b (equivalent to nn.Linear)
        "w_attn": 0.02 * jax.random.normal(k_wa, (C, 3 * C), dtype=jnp.float32),
        "b_attn": 0.02 * jax.random.normal(k_ba, (1, 3 * C), dtype=jnp.float32),
        "w_proj": 0.02 * jax.random.normal(k_wp, (C, C), dtype=jnp.float32),
        "b_proj": 0.02 * jax.random.normal(k_bp, (1, C), dtype=jnp.float32),
    }

    # --- unit check: tiled K-accumulating linear (forces a (2, 3, 2) grid) ---
    y_lin = linear(
        x.reshape(B * T, C), params["w_attn"], params["b_attn"],
        tm_cap=16, tn_cap=256, tk_cap=128,
    )
    y_lin = jax.block_until_ready(y_lin)
    y_lin_ref = (
        jnp.dot(x.reshape(B * T, C), params["w_attn"],
                precision=jax.lax.Precision.HIGHEST)
        + params["b_attn"][0]
    )
    assert jnp.allclose(y_lin, y_lin_ref, atol=5e-3, rtol=5e-3), "linear mismatch"

    # --- full forward, f32; attn_block=8 -> 2x2 kv grid exercises causal skip ---
    out = causal_self_attention(x, params, n_head, attn_block=8)
    out = jax.block_until_ready(out)
    ref = reference(x, params, n_head)
    assert out.shape == (B, T, C)
    assert jnp.allclose(out, ref, atol=5e-3, rtol=5e-3), "f32 forward mismatch"

    # --- full forward with bf16 operands (MXU-native path), loose tolerance ---
    x_bf16 = x.astype(jnp.bfloat16)
    params_bf16 = {kk: vv.astype(jnp.bfloat16) for kk, vv in params.items()}
    out_bf16 = causal_self_attention(x_bf16, params_bf16, n_head, attn_block=16)
    out_bf16 = jax.block_until_ready(out_bf16)
    assert out_bf16.shape == (B, T, C)
    assert jnp.allclose(out_bf16.astype(jnp.float32), ref, atol=3e-2, rtol=5e-2), (
        "bf16 forward mismatch"
    )

    print("KERNEL_OK")
</pallas_src>

<mosaic_0001>
module attributes {stable_mosaic.version = 11 : i64} {
  func.func @_linear_kernel(%arg0: i32, %arg1: i32, %arg2: i32, %arg3: memref<16x128xf32, #tpu.memory_space<vmem>>, %arg4: memref<128x256xf32, #tpu.memory_space<vmem>>, %arg5: memref<1x256xf32, #tpu.memory_space<vmem>>, %arg6: memref<16x256xf32, #tpu.memory_space<vmem>>, %arg7: memref<16x256xf32, #tpu.memory_space<vmem>>) attributes {dimension_semantics = [#tpu.dimension_semantics<parallel>, #tpu.dimension_semantics<parallel>, #tpu.dimension_semantics<arbitrary>], iteration_bounds = array<i64: 2, 3, 2>, scalar_prefetch = 0 : i64, scratch_operands = 1 : i64, tpu.core_type = #tpu.core_type<tc>, window_params = [{transform_indices = @transform_0, window_bounds = array<i64: 16, 128>}, {transform_indices = @transform_1, window_bounds = array<i64: 128, 256>}, {transform_indices = @transform_2, window_bounds = array<i64: 1, 256>}, {transform_indices = @transform_3, window_bounds = array<i64: 16, 256>}]} {
    %c0_i32 = arith.constant 0 : i32
    %0 = arith.cmpi eq, %arg2, %c0_i32 : i32
    %1 = arith.extui %0 : i1 to i32
    %c0_i32_0 = arith.constant 0 : i32
    %2 = arith.cmpi ne, %1, %c0_i32_0 : i32
    scf.if %2 {
      %cst_9 = arith.constant 0.000000e+00 : f32
      %12 = vector.broadcast %cst_9 : f32 to vector<16x256xf32>
      %c0_10 = arith.constant 0 : index
      %c0_11 = arith.constant 0 : index
      %13 = vector.load %arg7[%c0_10, %c0_11] : memref<16x256xf32, #tpu.memory_space<vmem>>, vector<16x256xf32>
      tpu.vector_store %arg7[%c0_10, %c0_11], %12 {strides = array<i32>} : memref<16x256xf32, #tpu.memory_space<vmem>>, vector<16x256xf32>,
    } else {
    }
    %c0 = arith.constant 0 : index
    %c0_1 = arith.constant 0 : index
    %3 = vector.load %arg7[%c0, %c0_1] : memref<16x256xf32, #tpu.memory_space<vmem>>, vector<16x256xf32>
    %c0_2 = arith.constant 0 : index
    %c0_3 = arith.constant 0 : index
    %4 = vector.load %arg3[%c0_2, %c0_3] : memref<16x128xf32, #tpu.memory_space<vmem>>, vector<16x128xf32>
    %c0_4 = arith.constant 0 : index
    %c0_5 = arith.constant 0 : index
    %5 = vector.load %arg4[%c0_4, %c0_5] : memref<128x256xf32, #tpu.memory_space<vmem>>, vector<128x256xf32>
    %cst = arith.constant dense<0.000000e+00> : vector<16x256xf32>
    %6 = tpu.matmul %4, %5, %cst {dimension_numbers = #tpu.dot_dimension_numbers<[1], [0], [0], [1], [0, 0, 1, 1], [], []>} : vector<16x128xf32>, vector<128x256xf32>, vector<16x256xf32> -> vector<16x256xf32>
    %7 = arith.addf %3, %6 : vector<16x256xf32>
    %c0_6 = arith.constant 0 : index
    %c0_7 = arith.constant 0 : index
    %8 = vector.load %arg7[%c0_6, %c0_7] : memref<16x256xf32, #tpu.memory_space<vmem>>, vector<16x256xf32>
    tpu.vector_store %arg7[%c0_6, %c0_7], %7 {strides = array<i32>} : memref<16x256xf32, #tpu.memory_space<vmem>>, vector<16x256xf32>,
    %c1_i32 = arith.constant 1 : i32
    %9 = arith.cmpi eq, %arg2, %c1_i32 : i32
    %10 = arith.extui %9 : i1 to i32
    %c0_i32_8 = arith.constant 0 : i32
    %11 = arith.cmpi ne, %10, %c0_i32_8 : i32
    scf.if %11 {
      %c0_9 = arith.constant 0 : index
      %c0_10 = arith.constant 0 : index
      %12 = vector.load %arg7[%c0_9, %c0_10] : memref<16x256xf32, #tpu.memory_space<vmem>>, vector<16x256xf32>
      %c0_11 = arith.constant 0 : index
      %c0_12 = arith.constant 0 : index
      %13 = vector.load %arg5[%c0_11, %c0_12] : memref<1x256xf32, #tpu.memory_space<vmem>>, vector<1x256xf32>
      %14 = vector.broadcast %13 : vector<1x256xf32> to vector<16x256xf32>
      %15 = arith.addf %12, %14 : vector<16x256xf32>
      %c0_13 = arith.constant 0 : index
      %c0_14 = arith.constant 0 : index
      %16 = vector.load %arg6[%c0_13, %c0_14] : memref<16x256xf32, #tpu.memory_space<vmem>>, vector<16x256xf32>
      tpu.vector_store %arg6[%c0_13, %c0_14], %15 {strides = array<i32>} : memref<16x256xf32, #tpu.memory_space<vmem>>, vector<16x256xf32>,
    } else {
    }
    return
  }
  func.func @transform_0(%arg0: i32, %arg1: i32, %arg2: i32) -> (i32, i32) {
    %c0_i32 = arith.constant 0 : i32
    return %arg0, %arg2 : i32, i32
  }
  func.func @transform_1(%arg0: i32, %arg1: i32, %arg2: i32) -> (i32, i32) {
    %c0_i32 = arith.constant 0 : i32
    return %arg2, %arg1 : i32, i32
  }
  func.func @transform_2(%arg0: i32, %arg1: i32, %arg2: i32) -> (i32, i32) {
    %c0_i32 = arith.constant 0 : i32
    %c0_i32_0 = arith.constant 0 : i32
    return %c0_i32, %arg1 : i32, i32
  }
  func.func @transform_3(%arg0: i32, %arg1: i32, %arg2: i32) -> (i32, i32) {
    %c0_i32 = arith.constant 0 : i32
    return %arg0, %arg1 : i32, i32
  }
}

</mosaic_0001>

<llo_original>
// kernel: tpu_custom_call.1
$region0: #{tpu_custom_call.1}
  #allocation0 [shape = 'u32[]', space=smem, size = 0x4, offset = 0x4, fixed_abs, tag = 'smem constant byte address 0x4 - core index']
  #allocation1 [shape = 'u32[144,128]{1,0:T(1,128)}', space=vmem, size = 0x12000, scoped, tag = 'internal scratch']
  #allocation2 [shape = 'f32[16,256]{1,0:T(8,128)}', space=vmem, size = 0x4000, scoped, tag = 'scratch operand']
  %s0 = inlined_call_operand.hbm [shape: f32[32,256], index: 0, kind: input, shape index: {}]
  %s1 = inlined_call_operand.hbm [shape: f32[256,768], index: 1, kind: input, shape index: {}]
  %s2 = inlined_call_operand.hbm [shape: f32[1,768], index: 2, kind: input, shape index: {}]
  %s3 = inlined_call_operand.hbm [shape: f32[32,768], index: 3, kind: output, shape index: {}]
  %s4 = sld [smem:[#allocation0]]
  $region65: #{tpu_custom_call.1} parent=0
    _
  %s6 = ssub.s32 1, %s4
  %s7 = scalar_select 0, %s6, %s4
  $region1: #{tpu_custom_call.1} parent=0
    #allocation3 [shape = 'u8[16384]{0}', space=vmem, size = 0x4000, scoped, tag = 'input window, operand 0']
    #allocation4 [shape = 's32[2]{0}', space=sflag, size = 0x8, scoped, tag = 'scoped memory for tpu_custom_call.1']
    #allocation5 [shape = 's32[2]{0}', space=sflag, size = 0x8, scoped, tag = 'scoped memory for tpu_custom_call.1']
    #allocation6 [shape = 'u8[262144]{0}', space=vmem, size = 0x40000, scoped, tag = 'input window, operand 1']
    #allocation7 [shape = 's32[2]{0}', space=sflag, size = 0x8, scoped, tag = 'scoped memory for tpu_custom_call.1']
    #allocation8 [shape = 'u8[2048]{0}', space=vmem, size = 0x800, scoped, tag = 'input window, operand 2']
    #allocation9 [shape = 'u8[32768]{0}', space=vmem, size = 0x8000, scoped, tag = 'output window, operand 0']
    %8 = vsyncpa [#allocation4], 0
    %s9 = scalar_lea.sflag [#allocation4], 1
    %10 = vsyncpa %s9, 0
    %11 = vsyncpa [#allocation7], 0
    %s12 = scalar_lea.sflag [#allocation7], 1
    %13 = vsyncpa %s12, 0
    %14 = vsyncpa [#allocation5], 0
    %s15 = scalar_lea.sflag [#allocation5], 1
    %16 = vsyncpa %s15, 0
    loop: start=0, step=1, limit=14
    $region2: #{tpu_custom_call.1} parent=1 // loop_pre_header
      _
    $region3: #{tpu_custom_call.1} parent=1 // loop_header
      %s18 = sphi 0, %s22
      %p19 = scmp.ge.s32.totalorder %s18, 14
      %s25 = sphi 0, %s44
      %s26 = sphi 0, %s40
      %s27 = sphi 0, %s36
      %s28 = sphi 0, %s25
      %s29 = sphi 0, %s26
      %s30 = sphi 0, %s27
      %s31 = sphi 0, %s28
      %s32 = sphi 0, %s29
      %s33 = sphi 0, %s30
      %s49 = sphi 0, %s51
      %s52 = sphi 0, %s49
      %s53 = sphi 0, %s52
      %s69 = sphi 0, %s53
      %s77 = sphi 0, %s79
      %s80 = sphi 0, %s77
      %s81 = sphi 0, %s80
      %s97 = sphi 0, %s81
      %s103 = sphi 0, %s105
      %s106 = sphi 0, %s103
      %s107 = sphi 0, %s106
      %s123 = sphi 0, %s107
      %s131 = sphi 0, %s133
      %s134 = sphi 0, %s131
      %s135 = sphi 0, %s134
      %s151 = sphi 0, %s135
    $region4: #{tpu_custom_call.1} parent=1 // loop_header_branch
      %21 = sbr.rel (%p19) target = $region8
    $region5: #{tpu_custom_call.1} parent=1 // loop_body
      %s23 = ssub.s32 %s18, 1
      %s24 = ssub.s32 %s18, 2
      %s34 = sadd.s32 1, %s27
      %p35 = scmp.ge.s32.totalorder %s34, 2
      %s36 = scalar_select %p35, 0, %s34
      %s37 = sadd.s32 1, %s26
      %s38 = scalar_select %p35, %s37, %s26
      %p39 = scmp.ge.s32.totalorder %s38, 3
      %s40 = scalar_select %p39, 0, %s38
      %s41 = sadd.s32 1, %s25
      %s42 = scalar_select %p39, %s41, %s25
      %p43 = scmp.ge.s32.totalorder %s42, 2
      %s44 = scalar_select %p43, 0, %s42
      %s45 = ssub.s32 %s25, %s44
      %s46 = ssub.s32 %s27, %s36
      %s47 = sor.u32 %s45, %s46
      %p48 = scmp.eq.s32.totalorder %s47, 0
      %s50 = sadd.s32 %s49, 1
      %s51 = scalar_select %p48, %s49, %s50
      %p54 = pneg %p48
      %p55 = scmp.eq.s32.totalorder %s18, 11
      %p56 = por %p54, %p55
      %p57 = scmp.ne.s32.totalorder %s49, %s52
      %p58 = scmp.eq.s32.totalorder %s18, 0
      %p59 = por %p57, %p58
      %p60 = scmp.ne.s32.totalorder %s49, %s52
      %p61 = scmp.eq.s32.totalorder %s23, 11
      %p62 = por %p60, %p61
      %p63 = scmp.ne.s32.totalorder %s52, %s53
      %p64 = scmp.eq.s32.totalorder %s23, 0
      %p65 = por %p63, %p64
      %p66 = scmp.ne.s32.totalorder %s52, %s53
      %p67 = scmp.eq.s32.totalorder %s24, 11
      %p68 = por %p66, %p67
      %p70 = scmp.ne.s32.totalorder %s53, %s69
      %p71 = scmp.eq.s32.totalorder %s24, 0
      %p72 = por %p70, %p71
      %s73 = ssub.s32 %s27, %s36
      %s74 = ssub.s32 %s26, %s40
      %s75 = sor.u32 %s73, %s74
      %p76 = scmp.eq.s32.totalorder %s75, 0
      %s78 = sadd.s32 %s77, 1
      %s79 = scalar_select %p76, %s77, %s78
      %p82 = pneg %p76
      %p83 = scmp.eq.s32.totalorder %s18, 11
      %p84 = por %p82, %p83
      %p85 = scmp.ne.s32.totalorder %s77, %s80
      %p86 = scmp.eq.s32.totalorder %s18, 0
      %p87 = por %p85, %p86
      %p88 = scmp.ne.s32.totalorder %s77, %s80
      %p89 = scmp.eq.s32.totalorder %s23, 11
      %p90 = por %p88, %p89
      %p91 = scmp.ne.s32.totalorder %s80, %s81
      %p92 = scmp.eq.s32.totalorder %s23, 0
      %p93 = por %p91, %p92
      %p94 = scmp.ne.s32.totalorder %s80, %s81
      %p95 = scmp.eq.s32.totalorder %s24, 11
      %p96 = por %p94, %p95
      %p98 = scmp.ne.s32.totalorder %s81, %s97
      %p99 = scmp.eq.s32.totalorder %s24, 0
      %p100 = por %p98, %p99
      %s101 = ssub.s32 %s26, %s40
      %p102 = scmp.eq.s32.totalorder %s101, 0
      %s104 = sadd.s32 %s103, 1
      %s105 = scalar_select %p102, %s103, %s104
      %p108 = pneg %p102
      %p109 = scmp.eq.s32.totalorder %s18, 11
      %p110 = por %p108, %p109
      %p111 = scmp.ne.s32.totalorder %s103, %s106
      %p112 = scmp.eq.s32.totalorder %s18, 0
      %p113 = por %p111, %p112
      %p114 = scmp.ne.s32.totalorder %s103, %s106
      %p115 = scmp.eq.s32.totalorder %s23, 11
      %p116 = por %p114, %p115
      %p117 = scmp.ne.s32.totalorder %s106, %s107
      %p118 = scmp.eq.s32.totalorder %s23, 0
      %p119 = por %p117, %p118
      %p120 = scmp.ne.s32.totalorder %s106, %s107
      %p121 = scmp.eq.s32.totalorder %s24, 11
      %p122 = por %p120, %p121
      %p124 = scmp.ne.s32.totalorder %s107, %s123
      %p125 = scmp.eq.s32.totalorder %s24, 0
      %p126 = por %p124, %p125
      %s127 = ssub.s32 %s25, %s44
      %s128 = ssub.s32 %s26, %s40
      %s129 = sor.u32 %s127, %s128
      %p130 = scmp.eq.s32.totalorder %s129, 0
      %s132 = sadd.s32 %s131, 1
      %s133 = scalar_select %p130, %s131, %s132
      %p136 = pneg %p130
      %p137 = scmp.eq.s32.totalorder %s18, 11
      %p138 = por %p136, %p137
      %p139 = scmp.ne.s32.totalorder %s131, %s134
      %p140 = scmp.eq.s32.totalorder %s18, 0
      %p141 = por %p139, %p140
      %p142 = scmp.ne.s32.totalorder %s131, %s134
      %p143 = scmp.eq.s32.totalorder %s23, 11
      %p144 = por %p142, %p143
      %p145 = scmp.ne.s32.totalorder %s134, %s135
      %p146 = scmp.eq.s32.totalorder %s23, 0
      %p147 = por %p145, %p146
      %p148 = scmp.ne.s32.totalorder %s134, %s135
      %p149 = scmp.eq.s32.totalorder %s24, 11
      %p150 = por %p148, %p149
      %p152 = scmp.ne.s32.totalorder %s135, %s151
      %p153 = scmp.eq.s32.totalorder %s24, 0
      %p154 = por %p152, %p153
      %p155 = scmp.le.s32.totalorder 1, %s18
      %p156 = scmp.lt.s32.totalorder %s18, 13
      %p157 = pnand %p155, %p156
      %p158 = pneg %p157
      // Predicated region
      $region9: #{tpu_custom_call.1} parent=5 // pred_check
        _
      $region10: #{tpu_custom_call.1} parent=5 // pred_check_branch
        %160 = sbr.rel (%p157) target = $region12
      $region11: #{tpu_custom_call.1} parent=5 // pred_region
        %s161 = ssub.s32 %s18, 1
      $region12: #{tpu_custom_call.1} parent=5 // pred_fallthru
        _
      %p162 = scmp.lt.s32.totalorder %s18, 12
      // Predicated region
      $region13: #{tpu_custom_call.1} parent=5 // pred_check
        %p163 = pneg %p162
      $region14: #{tpu_custom_call.1} parent=5 // pred_check_branch
        %165 = sbr.rel (%p163) target = $region16
      $region15: #{tpu_custom_call.1} parent=5 // pred_region
        // Predicated region
        $region17: #{tpu_custom_call.1} parent=15 // pred_check
          %p166 = pneg %p59
        $region18: #{tpu_custom_call.1} parent=15 // pred_check_branch
          %168 = sbr.rel (%p166) target = $region20
        $region19: #{tpu_custom_call.1} parent=15 // pred_region
          %s169 = sand.u32 %s49, 1
          %s170 = scalar_lea.sflag [#allocation4], %s169
          %s171 = sand.u32 %s49, 1
          %s172 = smul.addr %s171, 16
          %s173 = scalar_lea.vmem [#allocation3], %s172
          %s174 = smul.u32 2, %s25
          %s176 = ssub.s32 256, 256
          %177 = vsyncadd %s170, %s176
          %s178 = smul.addr %s174, 2
          %s179 = sadd.s32 %s27, %s178
          %s180 = smul.addr %s179, 128
          %s181 = scalar_lea.hbm %s0, %s180
          %s182 = sshll.u32 %s173, 4
          %s183 = int_to_ptr.vmem [resolvable:$true] %s182
          %188 = dma.hbm_to_vmem [thread:$0]  %s181, 256, %s183, %s170, 256, 128, 8
        $region20: #{tpu_custom_call.1} parent=15 // pred_fallthru
          _
        // Predicated region
        $region21: #{tpu_custom_call.1} parent=15 // pred_check
          %p189 = pneg %p87
        $region22: #{tpu_custom_call.1} parent=15 // pred_check_branch
          %191 = sbr.rel (%p189) target = $region24
        $region23: #{tpu_custom_call.1} parent=15 // pred_region
          %s192 = sand.u32 %s18, 1
          %s193 = scalar_lea.sflag [#allocation7], %s192
          %s194 = sand.u32 %s77, 1
          %s195 = smul.addr %s194, 256
          %s196 = scalar_lea.vmem [#allocation6], %s195
          %s197 = smul.u32 16, %s27
          %s198 = smul.u32 2, %s26
          %s200 = ssub.s32 4096, 4096
          %201 = vsyncadd %s193, %s200
          %s202 = smul.addr %s197, 6
          %s203 = sadd.s32 %s198, %s202
          %s204 = smul.addr %s203, 128
          %s205 = scalar_lea.hbm %s1, %s204
          %s206 = sshll.u32 %s196, 4
          %s207 = int_to_ptr.vmem [resolvable:$true] %s206
          %212 = dma.hbm_to_vmem [thread:$0]  %s205, 4096, %s207, %s193, 768, 256, 16
        $region24: #{tpu_custom_call.1} parent=15 // pred_fallthru
          _
        // Predicated region
        $region25: #{tpu_custom_call.1} parent=15 // pred_check
          %p213 = pneg %p113
        $region26: #{tpu_custom_call.1} parent=15 // pred_check_branch
          %215 = sbr.rel (%p213) target = $region28
        $region27: #{tpu_custom_call.1} parent=15 // pred_region
          %s216 = sand.u32 %s18, 1
          %s217 = scalar_lea.sflag [#allocation7], %s216
          %s218 = sand.u32 %s103, 1
          %s219 = smul.addr %s218, 2
          %s220 = scalar_lea.vmem [#allocation8], %s219
          %s221 = smul.u32 2, %s26
          %s223 = ssub.s32 32, 32
          %224 = vsyncadd %s217, %s223
          %s225 = smul.addr %s221, 16
          %s226 = scalar_lea.hbm %s2, %s225
          %s228 = sshll.u32 %s220, 4
          %s229 = int_to_ptr.vmem [resolvable:$true] %s228
          %231 = dma.hbm_to_vmem [thread:$0]  %s226, 32, %s229, %s217
        $region28: #{tpu_custom_call.1} parent=15 // pred_fallthru
          _
      $region16: #{tpu_custom_call.1} parent=5 // pred_fallthru
        _
      %p232 = scmp.le.s32.totalorder 1, %s18
      %p233 = scmp.lt.s32.totalorder %s18, 13
      %p234 = pnand %p232, %p233
      %p235 = pneg %p234
      // Predicated region
      $region29: #{tpu_custom_call.1} parent=5 // pred_check
        _
      $region30: #{tpu_custom_call.1} parent=5 // pred_check_branch
        %237 = sbr.rel (%p234) target = $region32
      $region31: #{tpu_custom_call.1} parent=5 // pred_region
        %s238 = ssub.s32 %s18, 1
        %s239 = sand.u32 %s52, 1
        %s240 = scalar_lea.sflag [#allocation4], %s239
        %s241 = sand.u32 %s52, 1
        %s242 = smul.addr %s241, 16
        %s243 = scalar_lea.vmem [#allocation3], %s242
        // Predicated region
        $region33: #{tpu_custom_call.1} parent=31 // pred_check
          %p244 = pneg %p65
        $region34: #{tpu_custom_call.1} parent=31 // pred_check_branch
          %246 = sbr.rel (%p244) target = $region36
        $region35: #{tpu_custom_call.1} parent=31 // pred_region
          %247 = dma.done %s240, 256
        $region36: #{tpu_custom_call.1} parent=31 // pred_fallthru
          _
        %s248 = sand.u32 %s23, 1
        %s249 = scalar_lea.sflag [#allocation7], %s248
        %s250 = sand.u32 %s80, 1
        %s251 = smul.addr %s250, 256
        %s252 = scalar_lea.vmem [#allocation6], %s251
        // Predicated region
        $region37: #{tpu_custom_call.1} parent=31 // pred_check
          %p253 = pneg %p93
        $region38: #{tpu_custom_call.1} parent=31 // pred_check_branch
          %255 = sbr.rel (%p253) target = $region40
        $region39: #{tpu_custom_call.1} parent=31 // pred_region
          %256 = dma.done %s249, 4096
        $region40: #{tpu_custom_call.1} parent=31 // pred_fallthru
          _
        %s257 = sand.u32 %s23, 1
        %s258 = scalar_lea.sflag [#allocation7], %s257
        %s259 = sand.u32 %s106, 1
        %s260 = smul.addr %s259, 2
        %s261 = scalar_lea.vmem [#allocation8], %s260
        // Predicated region
        $region41: #{tpu_custom_call.1} parent=31 // pred_check
          %p262 = pneg %p119
        $region42: #{tpu_custom_call.1} parent=31 // pred_check_branch
          %264 = sbr.rel (%p262) target = $region44
        $region43: #{tpu_custom_call.1} parent=31 // pred_region
          %265 = dma.done %s258, 32
        $region44: #{tpu_custom_call.1} parent=31 // pred_fallthru
          _
        %s266 = sand.u32 %s52, 1
        %s267 = scalar_lea.sflag [#allocation4], %s266
        %s268 = sand.u32 %s52, 1
        %s269 = smul.addr %s268, 16
        %s270 = scalar_lea.vmem [#allocation3], %s269
        %p271 = pneg %p65
        %p272 = pneg %p62
        %s273 = sand.u32 %s23, 1
        %s274 = scalar_lea.sflag [#allocation7], %s273
        %s275 = sand.u32 %s80, 1
        %s276 = smul.addr %s275, 256
        %s277 = scalar_lea.vmem [#allocation6], %s276
        %p278 = pneg %p93
        %p279 = pneg %p90
        %s280 = sand.u32 %s23, 1
        %s281 = scalar_lea.sflag [#allocation7], %s280
        %s282 = sand.u32 %s106, 1
        %s283 = smul.addr %s282, 2
        %s284 = scalar_lea.vmem [#allocation8], %s283
        %p285 = pneg %p119
        %p286 = pneg %p116
        %p287 = pneg %p147
        %p288 = pneg %p144
        %s289 = sand.u32 %s134, 1
        %s290 = scalar_lea.sflag [#allocation5], %s289
        %s291 = sand.u32 %s134, 1
        %s292 = smul.addr %s291, 32
        %s293 = scalar_lea.vmem [#allocation9], %s292
        %s294 = smul.u32 2, %s28
        %s295 = smul.u32 16, %s30
        %s296 = smul.u32 2, %s29
        %s297 = smul.u32 2, %s29
        %s298 = smul.u32 2, %s28
        %s299 = smul.u32 2, %s29
        %p300 = scmp.eq.s32.totalorder %s30, 0
        // Predicated region
        $region45: #{tpu_custom_call.1} parent=31 // pred_check
          %p301 = pneg %p300
        $region46: #{tpu_custom_call.1} parent=31 // pred_check_branch
          %303 = sbr.rel (%p301) target = $region48
        $region47: #{tpu_custom_call.1} parent=31 // pred_region
          %304 = vst [vmem:[#allocation2] sm:$0xff] 0.0
          %305 = vst [vmem:[#allocation2 + $0x8] sm:$0xff] 0.0
          %306 = vst [vmem:[#allocation2 + $0x10] sm:$0xff] 0.0
          %307 = vst [vmem:[#allocation2 + $0x18] sm:$0xff] 0.0
        $region48: #{tpu_custom_call.1} parent=31 // pred_fallthru
          _
        %v308 = vld [vmem:[#allocation2] sm:$0xff]
        %v309 = vld [vmem:[#allocation2 + $0x8] sm:$0xff]
        %v310 = vld [vmem:[#allocation2 + $0x10] sm:$0xff]
        %v311 = vld [vmem:[#allocation2 + $0x18] sm:$0xff]
        %v312 = vld [vmem:[%s243] sm:$0xff]
        %v313 = vld [vmem:[%s243 + $0x8] sm:$0xff]
        %v314 = vld [vmem:[%s252] sm:$0xff]
        %v315 = vld [vmem:[%s252 + $0x8] sm:$0xff]
        %v316 = vld [vmem:[%s252 + $0x10] sm:$0xff]
        %v317 = vld [vmem:[%s252 + $0x18] sm:$0xff]
        %v318 = vld [vmem:[%s252 + $0x20] sm:$0xff]
        %v319 = vld [vmem:[%s252 + $0x28] sm:$0xff]
        %v320 = vld [vmem:[%s252 + $0x30] sm:$0xff]
        %v321 = vld [vmem:[%s252 + $0x38] sm:$0xff]
        %v322 = vld [vmem:[%s252 + $0x40] sm:$0xff]
        %v323 = vld [vmem:[%s252 + $0x48] sm:$0xff]
        %v324 = vld [vmem:[%s252 + $0x50] sm:$0xff]
        %v325 = vld [vmem:[%s252 + $0x58] sm:$0xff]
        %v326 = vld [vmem:[%s252 + $0x60] sm:$0xff]
        %v327 = vld [vmem:[%s252 + $0x68] sm:$0xff]
        %v328 = vld [vmem:[%s252 + $0x70] sm:$0xff]
        %v329 = vld [vmem:[%s252 + $0x78] sm:$0xff]
        %v330 = vld [vmem:[%s252 + $0x80] sm:$0xff]
        %v331 = vld [vmem:[%s252 + $0x88] sm:$0xff]
        %v332 = vld [vmem:[%s252 + $0x90] sm:$0xff]
        %v333 = vld [vmem:[%s252 + $0x98] sm:$0xff]
        %v334 = vld [vmem:[%s252 + $0xa0] sm:$0xff]
        %v335 = vld [vmem:[%s252 + $0xa8] sm:$0xff]
        %v336 = vld [vmem:[%s252 + $0xb0] sm:$0xff]
        %v337 = vld [vmem:[%s252 + $0xb8] sm:$0xff]
        %v338 = vld [vmem:[%s252 + $0xc0] sm:$0xff]
        %v339 = vld [vmem:[%s252 + $0xc8] sm:$0xff]
        %v340 = vld [vmem:[%s252 + $0xd0] sm:$0xff]
        %v341 = vld [vmem:[%s252 + $0xd8] sm:$0xff]
        %v342 = vld [vmem:[%s252 + $0xe0] sm:$0xff]
        %v343 = vld [vmem:[%s252 + $0xe8] sm:$0xff]
        %v344 = vld [vmem:[%s252 + $0xf0] sm:$0xff]
        %v345 = vld [vmem:[%s252 + $0xf8] sm:$0xff]
        %346 = vmatprep.subr.mxu0 %v345
        %347 = vmatpush1.msra.mxu0 %v344
        %348 = vmatprep.subr.mxu0 %v343
        %349 = vmatpush1.msra.mxu0 %v342
        %350 = vmatprep.subr.mxu0 %v341
        %351 = vmatpush1.msra.mxu0 %v340
        %352 = vmatprep.subr.mxu0 %v339
        %353 = vmatpush1.msra.mxu0 %v338
        %354 = vmatprep.subr.mxu0 %v337
        %355 = vmatpush1.msra.mxu0 %v336
        %356 = vmatprep.subr.mxu0 %v335
        %357 = vmatpush1.msra.mxu0 %v334
        %358 = vmatprep.subr.mxu0 %v333
        %359 = vmatpush1.msra.mxu0 %v332
        %360 = vmatprep.subr.mxu0 %v331
        %361 = vmatpush1.msra.mxu0 %v330
        %362 = vmatprep.subr.mxu0 %v329
        %363 = vmatpush1.msra.mxu0 %v328
        %364 = vmatprep.subr.mxu0 %v327
        %365 = vmatpush1.msra.mxu0 %v326
        %366 = vmatprep.subr.mxu0 %v325
        %367 = vmatpush1.msra.mxu0 %v324
        %368 = vmatprep.subr.mxu0 %v323
        %369 = vmatpush1.msra.mxu0 %v322
        %370 = vmatprep.subr.mxu0 %v321
        %371 = vmatpush1.msra.mxu0 %v320
        %372 = vmatprep.subr.mxu0 %v319
        %373 = vmatpush1.msra.mxu0 %v318
        %374 = vmatprep.subr.mxu0 %v317
        %375 = vmatpush1.msra.mxu0 %v316
        %376 = vmatprep.subr.mxu0 %v315
        %377 = vmatpush1.msra.mxu0 %v314
        %378 = vmatprep.subr.mxu0 0.0
        %379 = vmatpush2.msra.mxu0 0.0
        %380 = vmatprep.subr.mxu0 0.0
        %381 = vmatpush2.msra.mxu0 0.0
        %382 = vmatprep.subr.mxu0 0.0
        %383 = vmatpush2.msra.mxu0 0.0
        %384 = vmatprep.subr.mxu0 0.0
        %385 = vmatpush2.msra.mxu0 0.0
        %386 = vmatprep.subr.mxu0 0.0
        %387 = vmatpush2.msra.mxu0 0.0
        %388 = vmatprep.subr.mxu0 0.0
        %389 = vmatpush2.msra.mxu0 0.0
        %390 = vmatprep.subr.mxu0 0.0
        %391 = vmatpush2.msra.mxu0 0.0
        %392 = vmatprep.subr.mxu0 0.0
        %393 = vmatpush2.msra.mxu0 0.0
        %394 = vmatprep.subr.mxu0 0.0
        %395 = vmatpush2.msra.mxu0 0.0
        %396 = vmatprep.subr.mxu0 0.0
        %397 = vmatpush2.msra.mxu0 0.0
        %398 = vmatprep.subr.mxu0 0.0
        %399 = vmatpush2.msra.mxu0 0.0
        %400 = vmatprep.subr.mxu0 0.0
        %401 = vmatpush2.msra.mxu0 0.0
        %402 = vmatprep.subr.mxu0 0.0
        %403 = vmatpush2.msra.mxu0 0.0
        %404 = vmatprep.subr.mxu0 0.0
        %405 = vmatpush2.msra.mxu0 0.0
        %406 = vmatprep.subr.mxu0 0.0
        %407 = vmatpush2.msra.mxu0 0.0
        %408 = vmatprep.subr.mxu0 0.0
        %409 = vmatpush2.msra.mxu0 0.0
        %410 = vmatprep.mubr.f32.mxu0 0.0
        %411 = vmatmul.mubr.f32.gmra.mxu0 %v312
        %v412 = vpop.f32.mrf.mxu0
        %v413 = vadd.f32 0.0, %v412
        %v414 = vpop.f32.mrf.mxu0
        %v415 = vadd.f32 0.0, %v414
        %416 = vmatprep.mubr.f32.mxu0 0.0
        %417 = vmatmul.mubr.f32.gmra.mxu0 %v313
        %v418 = vpop.f32.mrf.mxu0
        %v419 = vadd.f32 0.0, %v418
        %v420 = vpop.f32.mrf.mxu0
        %v421 = vadd.f32 0.0, %v420
        %422 = vdwg.mxu0
        %v423 = vadd.f32 %v308, %v413
        %v424 = vadd.f32 %v309, %v415
        %v425 = vadd.f32 %v310, %v419
        %v426 = vadd.f32 %v311, %v421
        %427 = vst [vmem:[#allocation2] sm:$0xff] %v423
        %428 = vst [vmem:[#allocation2 + $0x8] sm:$0xff] %v424
        %429 = vst [vmem:[#allocation2 + $0x10] sm:$0xff] %v425
        %430 = vst [vmem:[#allocation2 + $0x18] sm:$0xff] %v426
        %p431 = scmp.eq.s32.totalorder %s30, 1
        // Predicated region
        $region49: #{tpu_custom_call.1} parent=31 // pred_check
          %p432 = pneg %p431
        $region50: #{tpu_custom_call.1} parent=31 // pred_check_branch
          %434 = sbr.rel (%p432) target = $region52
        $region51: #{tpu_custom_call.1} parent=31 // pred_region
          %v435 = vld [vmem:[#allocation2] sm:$0xff]
          %v436 = vld [vmem:[#allocation2 + $0x8] sm:$0xff]
          %v437 = vld [vmem:[#allocation2 + $0x10] sm:$0xff]
          %v438 = vld [vmem:[#allocation2 + $0x18] sm:$0xff]
          %v439 = vld [vmem:[%s261] sm:$0x3]
          %v441 = vlaneseq
          %v442 = vshrl.u32 %v441, 7
          %v443 = vsub.s32 0, %v442
          %v444 = vrot.slane %v439, %v443
          %v445 = vlaneseq
          %v446 = vshrl.u32 %v445, 7
          %v447 = vsub.s32 1, %v446
          %v448 = vrot.slane %v439, %v447
          %v451 = vadd.f32 %v435, %v444
          %v452 = vadd.f32 %v436, %v448
          %v453 = vadd.f32 %v437, %v444
          %v454 = vadd.f32 %v438, %v448
          %455 = vst [vmem:[%s293] sm:$0xff] %v451
          %456 = vst [vmem:[%s293 + $0x8] sm:$0xff] %v452
          %457 = vst [vmem:[%s293 + $0x10] sm:$0xff] %v453
          %458 = vst [vmem:[%s293 + $0x18] sm:$0xff] %v454
        $region52: #{tpu_custom_call.1} parent=31 // pred_fallthru
          _
        %s459 = sand.u32 %s134, 1
        %s460 = scalar_lea.sflag [#allocation5], %s459
        %s461 = sand.u32 %s134, 1
        %s462 = smul.addr %s461, 32
        %s463 = scalar_lea.vmem [#allocation9], %s462
        // Predicated region
        $region53: #{tpu_custom_call.1} parent=31 // pred_check
          %p464 = pneg %p144
        $region54: #{tpu_custom_call.1} parent=31 // pred_check_branch
          %466 = sbr.rel (%p464) target = $region56
        $region55: #{tpu_custom_call.1} parent=31 // pred_region
          %s467 = smul.u32 2, %s28
          %s468 = smul.u32 2, %s29
          %s470 = ssub.s32 512, 512
          %471 = vsyncadd %s460, %s470
          %s472 = smul.addr %s467, 6
          %s473 = sadd.s32 %s468, %s472
          %s474 = smul.addr %s473, 128
          %s475 = scalar_lea.hbm %s3, %s474
          %s476 = sshll.u32 %s463, 4
          %s477 = int_to_ptr.vmem [resolvable:$true] %s476
          %482 = dma.vmem_to_hbm [thread:$0]  %s477, 512, %s475, %s460, 256, 768, 16
        $region56: #{tpu_custom_call.1} parent=31 // pred_fallthru
          _
      $region32: #{tpu_custom_call.1} parent=5 // pred_fallthru
        _
      %p483 = scmp.le.s32.totalorder 2, %s18
      // Predicated region
      $region57: #{tpu_custom_call.1} parent=5 // pred_check
        %p484 = pneg %p483
      $region58: #{tpu_custom_call.1} parent=5 // pred_check_branch
        %486 = sbr.rel (%p484) target = $region60
      $region59: #{tpu_custom_call.1} parent=5 // pred_region
        %s487 = ssub.s32 %s18, 2
        // Predicated region
        $region61: #{tpu_custom_call.1} parent=59 // pred_check
          %p488 = pneg %p150
        $region62: #{tpu_custom_call.1} parent=59 // pred_check_branch
          %490 = sbr.rel (%p488) target = $region64
        $region63: #{tpu_custom_call.1} parent=59 // pred_region
          %s491 = sand.u32 %s135, 1
          %s492 = scalar_lea.sflag [#allocation5], %s491
          %s493 = sand.u32 %s135, 1
          %s494 = smul.addr %s493, 32
          %s495 = scalar_lea.vmem [#allocation9], %s494
          %496 = dma.done %s492, 512
        $region64: #{tpu_custom_call.1} parent=59 // pred_fallthru
          _
      $region60: #{tpu_custom_call.1} parent=5 // pred_fallthru
        _
    $region6: #{tpu_custom_call.1} parent=1 // loop_footer
      %s22 = sadd.s32 1, %s18
    $region7: #{tpu_custom_call.1} parent=1 // loop_footer_branch
      %17 = sbr.rel target = $region3
    $region8: #{tpu_custom_call.1} parent=1 // loop_exit
      _
    %497 = vsyncpa [#allocation4], 1
    %s498 = scalar_lea.sflag [#allocation4], 1
    %499 = vsyncpa %s498, 1
    %500 = vsyncpa [#allocation7], 1
    %s501 = scalar_lea.sflag [#allocation7], 1
    %502 = vsyncpa %s501, 1
    %503 = vsyncpa [#allocation5], 1
    %s504 = scalar_lea.sflag [#allocation5], 1
    %505 = vsyncpa %s504, 1

</llo_original>
